<compile_context>
chip_gen: v6e
topology: v6e:2x2x1
jax: 0.10.0
libtpu: 0.0.40
codegen_flags: <defaults>
</compile_context>

<pallas_src>
import functools

import numpy as np
import jax
import jax.numpy as jnp
from jax import lax
from jax.experimental import pallas as pl
from jax.experimental.pallas import tpu as pltpu


# ---------------------------------------------------------------------------
# Pallas kernel
# ---------------------------------------------------------------------------
def weighted_loss_kernel(x_ref, y_ref, seg_ref, out_ref, acc_num, acc_den, *, lmax):
    i = pl.program_id(0)

    @pl.when(i == 0)
    def _init():
        acc_num[...] = jnp.zeros_like(acc_num)
        acc_den[...] = jnp.zeros_like(acc_den)

    x = x_ref[...]                       # [TZ, W] f32, lane-dense
    y = y_ref[...]                       # [TZ, W] f32
    d = x - y
    d2 = d * d

    TZ, W = x_ref.shape                  # static block shape
    nsub = TZ // 8
    # Fold the TZ rows into sublane groups of 8 and accumulate with pure VPU
    # adds into the persistent (8, W) accumulators (no per-tile XLU reduce,
    # no per-tile MXU work).
    acc_num[...] += jnp.sum(d2.reshape(nsub, 8, W), axis=0)
    acc_den[...] += jnp.sum(y.reshape(nsub, 8, W), axis=0)

    @pl.when(i == pl.num_programs(0) - 1)
    def _finalize():
        seg = seg_ref[...]               # [W, 128] one-hot lane->l map (zero-padded)
        num_l = jnp.sum(
            jnp.dot(acc_num[...], seg, preferred_element_type=jnp.float32),
            axis=0, keepdims=True)       # [1, 128] per-l sum of (x-y)^2
        den_l = jnp.sum(
            jnp.dot(acc_den[...], seg, preferred_element_type=jnp.float32),
            axis=0, keepdims=True)       # [1, 128] per-l sum of target

        col = lax.broadcasted_iota(jnp.int32, num_l.shape, 1)
        valid = col < lmax
        safe_den = jnp.where(valid, den_l, 1.0)     # mask BEFORE divide: no 0/0
        # exact divide (runs once, on a single [1,128] vector)
        terms = jnp.where(valid, num_l / safe_den, 0.0)
        out_ref[0, 0] = jnp.sum(terms)


# ---------------------------------------------------------------------------
# Segment matrix (cached per configuration, built once on the host)
# ---------------------------------------------------------------------------
@functools.lru_cache(maxsize=None)
def _segment_matrix(C, lmax, fold, W):
    seg = np.zeros((W, 128), dtype=np.float32)
    for f in range(fold):
        base = f * C
        for l in range(lmax):
            seg[base + l * l: base + (l + 1) * (l + 1), l] = 1.0
    return seg


def _choose_tile_rows(R, W):
    # 2 inputs x 2 pipeline buffers x TZ x W x 4B <= ~8 MiB (headroom even on
    # v5e's 16 MiB scoped-VMEM default; tiny vs v6e 128 MiB / v7x 64 MiB).
    budget_bytes = 8 * 1024 * 1024
    tz = budget_bytes // (2 * 2 * W * 4)
    tz = max(8, min(tz, 1024))
    tz = (tz // 8) * 8
    r8 = ((R + 7) // 8) * 8
    return min(tz, r8)


# ---------------------------------------------------------------------------
# Wrapper
# ---------------------------------------------------------------------------
def weighted_loss(x, y, lmax):
    """x, y: [..., C] SH coefficients with C >= lmax**2. Returns scalar loss."""
    assert 1 <= lmax <= 128, "segment matrix holds at most 128 l-columns"
    C = x.shape[-1]
    assert C >= lmax * lmax, "need at least lmax**2 coefficients on the last dim"

    x2 = x.reshape(-1, C).astype(jnp.float32)
    y2 = y.reshape(-1, C).astype(jnp.float32)
    Z = x2.shape[0]

    # ---- lane-dense layout ------------------------------------------------
    fold = max(1, 128 // C) if C <= 128 else 1
    W_used = fold * C
    W = ((W_used + 127) // 128) * 128

    # pad batch rows so they fold evenly; zero pads contribute 0 to both sums
    Zf = ((Z + fold - 1) // fold) * fold
    if Zf != Z:
        x2 = jnp.pad(x2, ((0, Zf - Z), (0, 0)))
        y2 = jnp.pad(y2, ((0, Zf - Z), (0, 0)))
    R = Zf // fold
    x2 = x2.reshape(R, W_used)            # contiguous fold: rows -> lanes
    y2 = y2.reshape(R, W_used)
    if W != W_used:                       # lane-pad to a multiple of 128
        x2 = jnp.pad(x2, ((0, 0), (0, W - W_used)))
        y2 = jnp.pad(y2, ((0, 0), (0, W - W_used)))

    # ---- batch tiling -------------------------------------------------------
    TZ = _choose_tile_rows(R, W)
    Rp = ((R + TZ - 1) // TZ) * TZ
    if Rp != R:
        x2 = jnp.pad(x2, ((0, Rp - R), (0, 0)))
        y2 = jnp.pad(y2, ((0, Rp - R), (0, 0)))
    grid = (Rp // TZ,)

    seg = jnp.asarray(_segment_matrix(C, lmax, fold, W))   # [W, 128]

    n_elems = Rp * W
    flops = 4 * n_elems + 2 * (2 * 8 * W * 128) + 4 * 128
    bytes_accessed = 2 * n_elems * 4 + seg.size * 4 + 4

    out = pl.pallas_call(
        functools.partial(weighted_loss_kernel, lmax=lmax),
        out_shape=jax.ShapeDtypeStruct((1, 1), jnp.float32),
        grid_spec=pltpu.PrefetchScalarGridSpec(
            num_scalar_prefetch=0,
            grid=grid,
            in_specs=[
                pl.BlockSpec((TZ, W), lambda i: (i, 0)),
                pl.BlockSpec((TZ, W), lambda i: (i, 0)),
                pl.BlockSpec(memory_space=pltpu.MemorySpace.VMEM),  # seg, resident
            ],
            out_specs=pl.BlockSpec(memory_space=pltpu.MemorySpace.SMEM),
            scratch_shapes=[
                pltpu.VMEM((8, W), jnp.float32),   # acc_num
                pltpu.VMEM((8, W), jnp.float32),   # acc_den
            ],
        ),
        compiler_params=pltpu.CompilerParams(
            dimension_semantics=("arbitrary",),     # accumulator carried across grid
            vmem_limit_bytes=32 * 1024 * 1024,
        ),
        cost_estimate=pl.CostEstimate(
            flops=flops, transcendentals=0, bytes_accessed=bytes_accessed),
    )(x2, y2, seg)
    # TODO(synk): on v7x a leading core-parallel grid axis with per-core partial
    # (1,128) num/den outputs could use both TensorCores' DMA paths.
    return out[0, 0]


# ---------------------------------------------------------------------------
# Pure-JAX reference (literal transcription of the PyTorch forward).
# ---------------------------------------------------------------------------
def reference_loss(x, y, lmax):
    loss = 0.0
    start = 0
    for l in range(lmax):
        end = start + 2 * l + 1
        w = 1.0 / jnp.mean(y[..., start:end])
        loss = loss + jnp.mean((x[..., start:end] - y[..., start:end]) ** 2) * w
        start = end
    return loss


if __name__ == "__main__":
    lmax = 3
    C = (lmax + 1) ** 2      # 16 coeffs; the module only reads the first lmax**2 = 9

    key = jax.random.PRNGKey(0)

    # --- small case (matches the module's typical toy shapes) ---------------
    batch = (2, 4)
    k1, k2 = jax.random.split(key)
    x = jax.random.normal(k1, batch + (C,), dtype=jnp.float32)
    # keep every per-l mean of the target well away from zero (the module
    # divides by mean(target slice) with no epsilon)
    y = 0.2 * jax.random.normal(k2, batch + (C,), dtype=jnp.float32) + 2.0

    loss = weighted_loss(x, y, lmax)
    jax.block_until_ready(loss)
    ref = reference_loss(x, y, lmax)
    np.testing.assert_allclose(np.asarray(loss), np.asarray(ref),
                               rtol=1e-4, atol=1e-5)

    # --- larger case: exercises multi-step grid + persistent accumulators ---
    batch2 = (64, 256)
    k3, k4 = jax.random.split(k2)
    x2 = jax.random.normal(k3, batch2 + (C,), dtype=jnp.float32)
    y2 = 0.2 * jax.random.normal(k4, batch2 + (C,), dtype=jnp.float32) + 2.0

    loss2 = weighted_loss(x2, y2, lmax)
    jax.block_until_ready(loss2)
    ref2 = reference_loss(x2, y2, lmax)
    np.testing.assert_allclose(np.asarray(loss2), np.asarray(ref2),
                               rtol=1e-4, atol=1e-5)

    print("KERNEL_OK")
</pallas_src>

<mosaic_0001>
module attributes {stable_mosaic.version = 11 : i64} {
  func.func @weighted_loss_kernel(%arg0: i32, %arg1: memref<8x128xf32, #tpu.memory_space<vmem>>, %arg2: memref<8x128xf32, #tpu.memory_space<vmem>>, %arg3: memref<128x128xf32, #tpu.memory_space<vmem>>, %arg4: memref<1x1xf32, #tpu.memory_space<smem>>, %arg5: memref<8x128xf32, #tpu.memory_space<vmem>>, %arg6: memref<8x128xf32, #tpu.memory_space<vmem>>) attributes {dimension_semantics = [#tpu.dimension_semantics<arbitrary>], iteration_bounds = array<i64: 1>, scalar_prefetch = 0 : i64, scratch_operands = 2 : i64, tpu.core_type = #tpu.core_type<tc>, window_params = [{transform_indices = @transform_0, window_bounds = array<i64: 8, 128>}, {transform_indices = @transform_1, window_bounds = array<i64: 8, 128>}, {pipeline_mode = #tpu.pipeline_mode<synchronous>, transform_indices = @transform_2, window_bounds = array<i64: 128, 128>}, {transform_indices = @transform_3, window_bounds = array<i64: 1, 1>}]} {
    %c0_i32 = arith.constant 0 : i32
    %0 = arith.cmpi eq, %arg0, %c0_i32 : i32
    %1 = arith.extui %0 : i1 to i32
    %c0_i32_0 = arith.constant 0 : i32
    %2 = arith.cmpi ne, %1, %c0_i32_0 : i32
    scf.if %2 {
      %cst_15 = arith.constant 0.000000e+00 : f32
      %20 = vector.broadcast %cst_15 : f32 to vector<8x128xf32>
      %c0_16 = arith.constant 0 : index
      %c0_17 = arith.constant 0 : index
      %21 = vector.load %arg5[%c0_16, %c0_17] : memref<8x128xf32, #tpu.memory_space<vmem>>, vector<8x128xf32>
      tpu.vector_store %arg5[%c0_16, %c0_17], %20 {strides = array<i32>} : memref<8x128xf32, #tpu.memory_space<vmem>>, vector<8x128xf32>,
      %cst_18 = arith.constant 0.000000e+00 : f32
      %22 = vector.broadcast %cst_18 : f32 to vector<8x128xf32>
      %c0_19 = arith.constant 0 : index
      %c0_20 = arith.constant 0 : index
      %23 = vector.load %arg6[%c0_19, %c0_20] : memref<8x128xf32, #tpu.memory_space<vmem>>, vector<8x128xf32>
      tpu.vector_store %arg6[%c0_19, %c0_20], %22 {strides = array<i32>} : memref<8x128xf32, #tpu.memory_space<vmem>>, vector<8x128xf32>,
    } else {
    }
    %c0 = arith.constant 0 : index
    %c0_1 = arith.constant 0 : index
    %3 = vector.load %arg1[%c0, %c0_1] : memref<8x128xf32, #tpu.memory_space<vmem>>, vector<8x128xf32>
    %c0_2 = arith.constant 0 : index
    %c0_3 = arith.constant 0 : index
    %4 = vector.load %arg2[%c0_2, %c0_3] : memref<8x128xf32, #tpu.memory_space<vmem>>, vector<8x128xf32>
    %5 = arith.subf %3, %4 : vector<8x128xf32>
    %6 = arith.mulf %5, %5 : vector<8x128xf32>
    %c0_4 = arith.constant 0 : index
    %c0_5 = arith.constant 0 : index
    %7 = vector.load %arg5[%c0_4, %c0_5] : memref<8x128xf32, #tpu.memory_space<vmem>>, vector<8x128xf32>
    %8 = vector.shape_cast %6 : vector<8x128xf32> to vector<1x8x128xf32>
    %cst = arith.constant dense<0.000000e+00> : vector<8x128xf32>
    %9 = vector.multi_reduction <add>, %8, %cst [0] : vector<1x8x128xf32> to vector<8x128xf32>
    %10 = arith.addf %7, %9 : vector<8x128xf32>
    %c0_6 = arith.constant 0 : index
    %c0_7 = arith.constant 0 : index
    %11 = vector.load %arg5[%c0_6, %c0_7] : memref<8x128xf32, #tpu.memory_space<vmem>>, vector<8x128xf32>
    tpu.vector_store %arg5[%c0_6, %c0_7], %10 {strides = array<i32>} : memref<8x128xf32, #tpu.memory_space<vmem>>, vector<8x128xf32>,
    %c0_8 = arith.constant 0 : index
    %c0_9 = arith.constant 0 : index
    %12 = vector.load %arg6[%c0_8, %c0_9] : memref<8x128xf32, #tpu.memory_space<vmem>>, vector<8x128xf32>
    %13 = vector.shape_cast %4 : vector<8x128xf32> to vector<1x8x128xf32>
    %cst_10 = arith.constant dense<0.000000e+00> : vector<8x128xf32>
    %14 = vector.multi_reduction <add>, %13, %cst_10 [0] : vector<1x8x128xf32> to vector<8x128xf32>
    %15 = arith.addf %12, %14 : vector<8x128xf32>
    %c0_11 = arith.constant 0 : index
    %c0_12 = arith.constant 0 : index
    %16 = vector.load %arg6[%c0_11, %c0_12] : memref<8x128xf32, #tpu.memory_space<vmem>>, vector<8x128xf32>
    tpu.vector_store %arg6[%c0_11, %c0_12], %15 {strides = array<i32>} : memref<8x128xf32, #tpu.memory_space<vmem>>, vector<8x128xf32>,
    %c0_i32_13 = arith.constant 0 : i32
    %17 = arith.cmpi eq, %arg0, %c0_i32_13 : i32
    %18 = arith.extui %17 : i1 to i32
    %c0_i32_14 = arith.constant 0 : i32
    %19 = arith.cmpi ne, %18, %c0_i32_14 : i32
    scf.if %19 {
      %c0_15 = arith.constant 0 : index
      %c0_16 = arith.constant 0 : index
      %20 = vector.load %arg3[%c0_15, %c0_16] : memref<128x128xf32, #tpu.memory_space<vmem>>, vector<128x128xf32>
      %c0_17 = arith.constant 0 : index
      %c0_18 = arith.constant 0 : index
      %21 = vector.load %arg5[%c0_17, %c0_18] : memref<8x128xf32, #tpu.memory_space<vmem>>, vector<8x128xf32>
      %cst_19 = arith.constant dense<0.000000e+00> : vector<8x128xf32>
      %22 = tpu.matmul %21, %20, %cst_19 {dimension_numbers = #tpu.dot_dimension_numbers<[1], [0], [0], [1], [0, 0, 1, 1], [], []>} : vector<8x128xf32>, vector<128x128xf32>, vector<8x128xf32> -> vector<8x128xf32>
      %cst_20 = arith.constant dense<0.000000e+00> : vector<128xf32>
      %23 = vector.multi_reduction <add>, %22, %cst_20 [0] : vector<8x128xf32> to vector<128xf32>
      %24 = vector.shape_cast %23 : vector<128xf32> to vector<1x128xf32>
      %c0_21 = arith.constant 0 : index
      %c0_22 = arith.constant 0 : index
      %25 = vector.load %arg6[%c0_21, %c0_22] : memref<8x128xf32, #tpu.memory_space<vmem>>, vector<8x128xf32>
      %cst_23 = arith.constant dense<0.000000e+00> : vector<8x128xf32>
      %26 = tpu.matmul %25, %20, %cst_23 {dimension_numbers = #tpu.dot_dimension_numbers<[1], [0], [0], [1], [0, 0, 1, 1], [], []>} : vector<8x128xf32>, vector<128x128xf32>, vector<8x128xf32> -> vector<8x128xf32>
      %cst_24 = arith.constant dense<0.000000e+00> : vector<128xf32>
      %27 = vector.multi_reduction <add>, %26, %cst_24 [0] : vector<8x128xf32> to vector<128xf32>
      %28 = vector.shape_cast %27 : vector<128xf32> to vector<1x128xf32>
      %29 = tpu.iota {dimensions = array<i32: 1>} : vector<1x128xi32>
      %c3_i32 = arith.constant 3 : i32
      %30 = vector.broadcast %c3_i32 : i32 to vector<1x128xi32>
      %31 = arith.cmpi slt, %29, %30 : vector<1x128xi32>
      %cst_25 = arith.constant 1.000000e+00 : f32
      %32 = vector.broadcast %cst_25 : f32 to vector<1x128xf32>
      %33 = arith.select %31, %28, %32 : vector<1x128xi1>, vector<1x128xf32>
      %34 = arith.divf %24, %33 : vector<1x128xf32>
      %cst_26 = arith.constant 0.000000e+00 : f32
      %35 = vector.broadcast %cst_26 : f32 to vector<1x128xf32>
      %36 = arith.select %31, %34, %35 : vector<1x128xi1>, vector<1x128xf32>
      %37 = vector.shape_cast %36 : vector<1x128xf32> to vector<1x1x128xf32>
      %cst_27 = arith.constant dense<0.000000e+00> : vector<1xf32>
      %38 = vector.multi_reduction <add>, %37, %cst_27 [1, 2] : vector<1x1x128xf32> to vector<1xf32>
      %39 = vector.shape_cast %38 : vector<1xf32> to vector<1x1x1xf32>
      %40 = vector.extract %39[0, 0, 0] : f32 from vector<1x1x1xf32>
      %c0_28 = arith.constant 0 : index
      %c0_29 = arith.constant 0 : index
      %41 = memref.load %arg4[%c0_28, %c0_29] : memref<1x1xf32, #tpu.memory_space<smem>>
      memref.store %40, %arg4[%c0_28, %c0_29] : memref<1x1xf32, #tpu.memory_space<smem>>
    } else {
    }
    return
  }
  func.func @transform_0(%arg0: i32) -> (i32, i32) {
    %c0_i32 = arith.constant 0 : i32
    %c0_i32_0 = arith.constant 0 : i32
    return %arg0, %c0_i32 : i32, i32
  }
  func.func @transform_1(%arg0: i32) -> (i32, i32) {
    %c0_i32 = arith.constant 0 : i32
    %c0_i32_0 = arith.constant 0 : i32
    return %arg0, %c0_i32 : i32, i32
  }
  func.func @transform_2(%arg0: i32) -> (i32, i32) {
    %c0_i32 = arith.constant 0 : i32
    %c0_i32_0 = arith.constant 0 : i32
    %c0_i32_1 = arith.constant 0 : i32
    return %c0_i32, %c0_i32_0 : i32, i32
  }
  func.func @transform_3(%arg0: i32) -> (i32, i32) {
    %c0_i32 = arith.constant 0 : i32
    %c0_i32_0 = arith.constant 0 : i32
    %c0_i32_1 = arith.constant 0 : i32
    return %c0_i32, %c0_i32_0 : i32, i32
  }
}

</mosaic_0001>

<llo_original>
// kernel: tpu_custom_call.1
$region0: #{tpu_custom_call.1}
  #allocation0 [shape = 'u32[]', space=smem, size = 0x4, offset = 0x4, fixed_abs, tag = 'smem constant byte address 0x4 - core index']
  #allocation1 [shape = 'u32[144,128]{1,0:T(1,128)}', space=vmem, size = 0x12000, scoped, tag = 'internal scratch']
  #allocation2 [shape = 'f32[8,128]{1,0:T(8,128)}', space=vmem, size = 0x1000, scoped, tag = 'scratch operand']
  #allocation3 [shape = 'f32[8,128]{1,0:T(8,128)}', space=vmem, size = 0x1000, scoped, tag = 'scratch operand']
  %s0 = inlined_call_operand.hbm [shape: f32[8,128], index: 0, kind: input, shape index: {}]
  %s1 = inlined_call_operand.hbm [shape: f32[8,128], index: 1, kind: input, shape index: {}]
  %s2 = inlined_call_operand.hbm [shape: f32[128,128], index: 2, kind: input, shape index: {}]
  %s3 = inlined_call_operand.hbm [shape: f32[1,1], index: 3, kind: output, shape index: {}]
  %s4 = sld [smem:[#allocation0]]
  $region42: #{tpu_custom_call.1} parent=0
    _
  %s6 = ssub.s32 1, %s4
  %s7 = scalar_select 0, %s6, %s4
  $region1: #{tpu_custom_call.1} parent=0
    #allocation4 [shape = 'u8[4096]{0}', space=vmem, size = 0x1000, scoped, tag = 'input window, operand 0, single buffered']
    #allocation5 [shape = 's32[1]{0}', space=sflag, size = 0x4, scoped, tag = 'scoped memory for tpu_custom_call.1']
    #allocation6 [shape = 's32[1]{0}', space=sflag, size = 0x4, scoped, tag = 'scoped memory for tpu_custom_call.1']
    #allocation7 [shape = 'u8[4096]{0}', space=vmem, size = 0x1000, scoped, tag = 'input window, operand 1, single buffered']
    #allocation8 [shape = 's32[1]{0}', space=sflag, size = 0x4, scoped, tag = 'scoped memory for tpu_custom_call.1']
    #allocation9 [shape = 'u8[65536]{0}', space=vmem, size = 0x10000, scoped, tag = 'input window, operand 2, single buffered']
    #allocation10 [shape = 'u8[512]{0}', space=smem, size = 0x200, scoped, tag = 'output window, operand 0, single buffered']
    %8 = vsyncpa [#allocation5], 0
    %9 = vsyncpa [#allocation8], 0
    %10 = vsyncpa [#allocation6], 0
    // Predicated region
    $region2: #{tpu_custom_call.1} parent=1 // pred_check
      _
    $region3: #{tpu_custom_call.1} parent=1 // pred_check_branch
      %12 = sbr.rel (0) target = $region5
    $region4: #{tpu_custom_call.1} parent=1 // pred_region
      %s14 = ssub.s32 128, 128
      %15 = vsyncadd [#allocation5], %s14
      %s17 = sshll.u32 [#allocation4], 4
      %s18 = int_to_ptr.vmem [resolvable:$true] %s17
      %20 = dma.hbm_to_vmem [thread:$0]  %s0, 128, %s18, [#allocation5]
    $region5: #{tpu_custom_call.1} parent=1 // pred_fallthru
      _
    // Predicated region
    $region6: #{tpu_custom_call.1} parent=1 // pred_check
      _
    $region7: #{tpu_custom_call.1} parent=1 // pred_check_branch
      %22 = sbr.rel (0) target = $region9
    $region8: #{tpu_custom_call.1} parent=1 // pred_region
      %s24 = ssub.s32 128, 128
      %25 = vsyncadd [#allocation8], %s24
      %s27 = sshll.u32 [#allocation7], 4
      %s28 = int_to_ptr.vmem [resolvable:$true] %s27
      %30 = dma.hbm_to_vmem [thread:$0]  %s1, 128, %s28, [#allocation8]
    $region9: #{tpu_custom_call.1} parent=1 // pred_fallthru
      _
    // Predicated region
    $region10: #{tpu_custom_call.1} parent=1 // pred_check
      _
    $region11: #{tpu_custom_call.1} parent=1 // pred_check_branch
      %32 = sbr.rel (0) target = $region13
    $region12: #{tpu_custom_call.1} parent=1 // pred_region
      %s34 = ssub.s32 2048, 2048
      %35 = vsyncadd [#allocation8], %s34
      %s36 = sshll.u32 [#allocation9], 4
      %s37 = int_to_ptr.vmem [resolvable:$true] %s36
      %42 = dma.hbm_to_vmem [thread:$0]  %s2, 2048, %s37, [#allocation8], 128, 128, 8
    $region13: #{tpu_custom_call.1} parent=1 // pred_fallthru
      _
    // Predicated region
    $region14: #{tpu_custom_call.1} parent=1 // pred_check
      _
    $region15: #{tpu_custom_call.1} parent=1 // pred_check_branch
      %44 = sbr.rel (0) target = $region17
    $region16: #{tpu_custom_call.1} parent=1 // pred_region
      %45 = dma.done [#allocation5], 128
    $region17: #{tpu_custom_call.1} parent=1 // pred_fallthru
      _
    // Predicated region
    $region18: #{tpu_custom_call.1} parent=1 // pred_check
      _
    $region19: #{tpu_custom_call.1} parent=1 // pred_check_branch
      %47 = sbr.rel (0) target = $region21
    $region20: #{tpu_custom_call.1} parent=1 // pred_region
      %48 = dma.done [#allocation8], 128
    $region21: #{tpu_custom_call.1} parent=1 // pred_fallthru
      _
    // Predicated region
    $region22: #{tpu_custom_call.1} parent=1 // pred_check
      _
    $region23: #{tpu_custom_call.1} parent=1 // pred_check_branch
      %50 = sbr.rel (0) target = $region25
    $region24: #{tpu_custom_call.1} parent=1 // pred_region
      %51 = dma.done [#allocation8], 2048
    $region25: #{tpu_custom_call.1} parent=1 // pred_fallthru
      _
    %p52 = scmp.eq.s32.totalorder 0, 0
    // Predicated region
    $region26: #{tpu_custom_call.1} parent=1 // pred_check
      %p53 = pneg %p52
    $region27: #{tpu_custom_call.1} parent=1 // pred_check_branch
      %55 = sbr.rel (%p53) target = $region29
    $region28: #{tpu_custom_call.1} parent=1 // pred_region
      %56 = vst [vmem:[#allocation2] sm:$0xff] 0.0
      %57 = vst [vmem:[#allocation3] sm:$0xff] 0.0
    $region29: #{tpu_custom_call.1} parent=1 // pred_fallthru
      _
    %v58 = vld [vmem:[#allocation4] sm:$0xff]
    %v59 = vld [vmem:[#allocation7] sm:$0xff]
    %v60 = vsub.f32 %v58, %v59
    %v61 = vmul.f32 %v60, %v60
    %v62 = vld [vmem:[#allocation2] sm:$0xff]
    %v63 = vadd.f32 %v61, 0.0
    %v64 = vadd.f32 %v62, %v63
    %65 = vst [vmem:[#allocation2] sm:$0xff] %v64
    %v66 = vld [vmem:[#allocation3] sm:$0xff]
    %v67 = vadd.f32 %v59, 0.0
    %v68 = vadd.f32 %v66, %v67
    %69 = vst [vmem:[#allocation3] sm:$0xff] %v68
    // Predicated region
    $region30: #{tpu_custom_call.1} parent=1 // pred_check
      %p70 = pneg %p52
    $region31: #{tpu_custom_call.1} parent=1 // pred_check_branch
      %72 = sbr.rel (%p70) target = $region33
    $region32: #{tpu_custom_call.1} parent=1 // pred_region
      %v73 = vld [vmem:[#allocation9] sm:$0xff]
      %v74 = vld [vmem:[#allocation9 + $0x8] sm:$0xff]
      %v75 = vld [vmem:[#allocation9 + $0x10] sm:$0xff]
      %v76 = vld [vmem:[#allocation9 + $0x18] sm:$0xff]
      %v77 = vld [vmem:[#allocation9 + $0x20] sm:$0xff]
      %v78 = vld [vmem:[#allocation9 + $0x28] sm:$0xff]
      %v79 = vld [vmem:[#allocation9 + $0x30] sm:$0xff]
      %v80 = vld [vmem:[#allocation9 + $0x38] sm:$0xff]
      %v81 = vld [vmem:[#allocation9 + $0x40] sm:$0xff]
      %v82 = vld [vmem:[#allocation9 + $0x48] sm:$0xff]
      %v83 = vld [vmem:[#allocation9 + $0x50] sm:$0xff]
      %v84 = vld [vmem:[#allocation9 + $0x58] sm:$0xff]
      %v85 = vld [vmem:[#allocation9 + $0x60] sm:$0xff]
      %v86 = vld [vmem:[#allocation9 + $0x68] sm:$0xff]
      %v87 = vld [vmem:[#allocation9 + $0x70] sm:$0xff]
      %v88 = vld [vmem:[#allocation9 + $0x78] sm:$0xff]
      %v89 = vld [vmem:[#allocation2] sm:$0xff]
      %90 = vmatprep.subr.mxu0 0.0
      %91 = vmatpush1.msra.mxu0 %v88
      %92 = vmatprep.subr.mxu0 0.0
      %93 = vmatpush1.msra.mxu0 %v87
      %94 = vmatprep.subr.mxu0 0.0
      %95 = vmatpush1.msra.mxu0 %v86
      %96 = vmatprep.subr.mxu0 0.0
      %97 = vmatpush1.msra.mxu0 %v85
      %98 = vmatprep.subr.mxu0 0.0
      %99 = vmatpush1.msra.mxu0 %v84
      %100 = vmatprep.subr.mxu0 0.0
      %101 = vmatpush1.msra.mxu0 %v83
      %102 = vmatprep.subr.mxu0 0.0
      %103 = vmatpush1.msra.mxu0 %v82
      %104 = vmatprep.subr.mxu0 0.0
      %105 = vmatpush1.msra.mxu0 %v81
      %106 = vmatprep.subr.mxu0 0.0
      %107 = vmatpush1.msra.mxu0 %v80
      %108 = vmatprep.subr.mxu0 0.0
      %109 = vmatpush1.msra.mxu0 %v79
      %110 = vmatprep.subr.mxu0 0.0
      %111 = vmatpush1.msra.mxu0 %v78
      %112 = vmatprep.subr.mxu0 0.0
      %113 = vmatpush1.msra.mxu0 %v77
      %114 = vmatprep.subr.mxu0 0.0
      %115 = vmatpush1.msra.mxu0 %v76
      %116 = vmatprep.subr.mxu0 0.0
      %117 = vmatpush1.msra.mxu0 %v75
      %118 = vmatprep.subr.mxu0 0.0
      %119 = vmatpush1.msra.mxu0 %v74
      %120 = vmatprep.subr.mxu0 0.0
      %121 = vmatpush1.msra.mxu0 %v73
      %122 = vmatprep.subr.mxu0 0.0
      %123 = vmatpush2.msra.mxu0 0.0
      %124 = vmatprep.subr.mxu0 0.0
      %125 = vmatpush2.msra.mxu0 0.0
      %126 = vmatprep.subr.mxu0 0.0
      %127 = vmatpush2.msra.mxu0 0.0
      %128 = vmatprep.subr.mxu0 0.0
      %129 = vmatpush2.msra.mxu0 0.0
      %130 = vmatprep.subr.mxu0 0.0
      %131 = vmatpush2.msra.mxu0 0.0
      %132 = vmatprep.subr.mxu0 0.0
      %133 = vmatpush2.msra.mxu0 0.0
      %134 = vmatprep.subr.mxu0 0.0
      %135 = vmatpush2.msra.mxu0 0.0
      %136 = vmatprep.subr.mxu0 0.0
      %137 = vmatpush2.msra.mxu0 0.0
      %138 = vmatprep.subr.mxu0 0.0
      %139 = vmatpush2.msra.mxu0 0.0
      %140 = vmatprep.subr.mxu0 0.0
      %141 = vmatpush2.msra.mxu0 0.0
      %142 = vmatprep.subr.mxu0 0.0
      %143 = vmatpush2.msra.mxu0 0.0
      %144 = vmatprep.subr.mxu0 0.0
      %145 = vmatpush2.msra.mxu0 0.0
      %146 = vmatprep.subr.mxu0 0.0
      %147 = vmatpush2.msra.mxu0 0.0
      %148 = vmatprep.subr.mxu0 0.0
      %149 = vmatpush2.msra.mxu0 0.0
      %150 = vmatprep.subr.mxu0 0.0
      %151 = vmatpush2.msra.mxu0 0.0
      %152 = vmatprep.subr.mxu0 0.0
      %153 = vmatpush2.msra.mxu0 0.0
      %154 = vmatprep.mubr.f32.mxu0 0.0
      %155 = vmatmul.mubr.f32.gmra.mxu0 %v89
      %v156 = vpop.f32.mrf.mxu0
      %v157 = vadd.f32 0.0, %v156
      %v158 = vpop.f32.mrf.mxu0
      %159 = vdwg.mxu0
      %v160 = vrot.slane %v157, 4
      %v161 = vadd.f32 %v157, %v160
      %v162 = vrot.slane %v161, 2
      %v163 = vadd.f32 %v161, %v162
      %v164 = vrot.slane %v163, 1
      %v165 = vadd.f32 %v163, %v164
      %v166 = vld [vmem:[#allocation3] sm:$0xff]
      %167 = vmatprep.subr.mxu0 0.0
      %168 = vmatpush1.msra.mxu0 %v88
      %169 = vmatprep.subr.mxu0 0.0
      %170 = vmatpush1.msra.mxu0 %v87
      %171 = vmatprep.subr.mxu0 0.0
      %172 = vmatpush1.msra.mxu0 %v86
      %173 = vmatprep.subr.mxu0 0.0
      %174 = vmatpush1.msra.mxu0 %v85
      %175 = vmatprep.subr.mxu0 0.0
      %176 = vmatpush1.msra.mxu0 %v84
      %177 = vmatprep.subr.mxu0 0.0
      %178 = vmatpush1.msra.mxu0 %v83
      %179 = vmatprep.subr.mxu0 0.0
      %180 = vmatpush1.msra.mxu0 %v82
      %181 = vmatprep.subr.mxu0 0.0
      %182 = vmatpush1.msra.mxu0 %v81
      %183 = vmatprep.subr.mxu0 0.0
      %184 = vmatpush1.msra.mxu0 %v80
      %185 = vmatprep.subr.mxu0 0.0
      %186 = vmatpush1.msra.mxu0 %v79
      %187 = vmatprep.subr.mxu0 0.0
      %188 = vmatpush1.msra.mxu0 %v78
      %189 = vmatprep.subr.mxu0 0.0
      %190 = vmatpush1.msra.mxu0 %v77
      %191 = vmatprep.subr.mxu0 0.0
      %192 = vmatpush1.msra.mxu0 %v76
      %193 = vmatprep.subr.mxu0 0.0
      %194 = vmatpush1.msra.mxu0 %v75
      %195 = vmatprep.subr.mxu0 0.0
      %196 = vmatpush1.msra.mxu0 %v74
      %197 = vmatprep.subr.mxu0 0.0
      %198 = vmatpush1.msra.mxu0 %v73
      %199 = vmatprep.subr.mxu0 0.0
      %200 = vmatpush2.msra.mxu0 0.0
      %201 = vmatprep.subr.mxu0 0.0
      %202 = vmatpush2.msra.mxu0 0.0
      %203 = vmatprep.subr.mxu0 0.0
      %204 = vmatpush2.msra.mxu0 0.0
      %205 = vmatprep.subr.mxu0 0.0
      %206 = vmatpush2.msra.mxu0 0.0
      %207 = vmatprep.subr.mxu0 0.0
      %208 = vmatpush2.msra.mxu0 0.0
      %209 = vmatprep.subr.mxu0 0.0
      %210 = vmatpush2.msra.mxu0 0.0
      %211 = vmatprep.subr.mxu0 0.0
      %212 = vmatpush2.msra.mxu0 0.0
      %213 = vmatprep.subr.mxu0 0.0
      %214 = vmatpush2.msra.mxu0 0.0
      %215 = vmatprep.subr.mxu0 0.0
      %216 = vmatpush2.msra.mxu0 0.0
      %217 = vmatprep.subr.mxu0 0.0
      %218 = vmatpush2.msra.mxu0 0.0
      %219 = vmatprep.subr.mxu0 0.0
      %220 = vmatpush2.msra.mxu0 0.0
      %221 = vmatprep.subr.mxu0 0.0
      %222 = vmatpush2.msra.mxu0 0.0
      %223 = vmatprep.subr.mxu0 0.0
      %224 = vmatpush2.msra.mxu0 0.0
      %225 = vmatprep.subr.mxu0 0.0
      %226 = vmatpush2.msra.mxu0 0.0
      %227 = vmatprep.subr.mxu0 0.0
      %228 = vmatpush2.msra.mxu0 0.0
      %229 = vmatprep.subr.mxu0 0.0
      %230 = vmatpush2.msra.mxu0 0.0
      %231 = vmatprep.mubr.f32.mxu0 0.0
      %232 = vmatmul.mubr.f32.gmra.mxu0 %v166
      %v233 = vpop.f32.mrf.mxu0
      %v234 = vadd.f32 0.0, %v233
      %v235 = vpop.f32.mrf.mxu0
      %236 = vdwg.mxu0
      %v237 = vrot.slane %v234, 4
      %v238 = vadd.f32 %v234, %v237
      %v239 = vrot.slane %v238, 2
      %v240 = vadd.f32 %v238, %v239
      %v241 = vrot.slane %v240, 1
      %v242 = vadd.f32 %v240, %v241
      %v243 = vlaneseq
      %v244 = vand.u32 %v243, 127
      %vm245 = vcmp.lt.s32.totalorder %v244, 3
      %v246 = vsel %vm245, %v242, 1.0
      %v247 = vrcp.pop %v246
      %v248 = vmul.f32 %v165, %v247
      %v249 = vsel %vm245, %v248, 0.0
      %vm250 = vcmask 1040384
      %v251 = vsel %vm250, %v249, 0.0
      %252 = vadd.xlane.f32.xlu0 %v251
      %v253 = vpop.xlane.xlu0 %252
      %v254 = vrot.slane %v253, 4
      %v255 = vadd.f32 %v253, %v254
      %v256 = vrot.slane %v255, 2
      %v257 = vadd.f32 %v255, %v256
      %v258 = vrot.slane %v257, 1
      %v259 = vadd.f32 %v257, %v258
      %s260 = vtos %v259
      %s261 = scalar_lea.smem [#allocation10], 0
      %262 = sst [smem:[%s261]] %s260
    $region33: #{tpu_custom_call.1} parent=1 // pred_fallthru
      _
    // Predicated region
    $region34: #{tpu_custom_call.1} parent=1 // pred_check
      _
    $region35: #{tpu_custom_call.1} parent=1 // pred_check_branch
      %264 = sbr.rel (0) target = $region37
    $region36: #{tpu_custom_call.1} parent=1 // pred_region
      %s266 = ssub.s32 16, 16
      %267 = vsyncadd [#allocation6], %s266
      %270 = dma.smem_to_hbm [#allocation10], 16, %s3, [#allocation6]
    $region37: #{tpu_custom_call.1} parent=1 // pred_fallthru
      _
    // Predicated region
    $region38: #{tpu_custom_call.1} parent=1 // pred_check
      _
    $region39: #{tpu_custom_call.1} parent=1 // pred_check_branch
      %272 = sbr.rel (0) target = $region41
    $region40: #{tpu_custom_call.1} parent=1 // pred_region
      %273 = dma.done [#allocation6], 16
    $region41: #{tpu_custom_call.1} parent=1 // pred_fallthru
      _
    %274 = sfence
    %275 = vsyncpa [#allocation5], 1
    %276 = vsyncpa [#allocation8], 1
    %277 = vsyncpa [#allocation6], 1

</llo_original>
